<compile_context>
chip_gen: v6e
topology: v6e:2x2x1
jax: 0.10.0
libtpu: 0.0.40
codegen_flags: <defaults>
</compile_context>

<pallas_src>
import numpy as np
import jax
import jax.numpy as jnp
from jax import lax
from jax.experimental import pallas as pl
from jax.experimental.pallas import tpu as pltpu


def _ln_rows(v, eps=1e-5):
    """LayerNorm over the last (lane/feature) axis, no affine.

    Two-moment form: the two lane reductions are independent and can issue
    back-to-back into the XLU.  var is clamped at 0 to guard against f32
    cancellation (E[x^2] - mu^2 can go slightly negative)."""
    inv_n = 1.0 / v.shape[-1]
    mu = jnp.sum(v, axis=-1, keepdims=True) * inv_n
    ex2 = jnp.sum(v * v, axis=-1, keepdims=True) * inv_n
    var = jnp.maximum(ex2 - mu * mu, 0.0)
    return (v - mu) * lax.rsqrt(var + eps)


def inside_pad_meta_kernel(x_ref, pv_ref, w_ref, cs_ref, out_ref):
    D = w_ref.shape[1]            # embed dim                     (static)
    BT = x_ref.shape[0]           # batch * num_token             (static)
    BL = cs_ref.shape[1]          # batch * num_border_tokens     (static)
    B = pv_ref.shape[0] - 6       # batch                         (static)

    # packed rows: [meta (B rows, zero-padded to D) | b_enc | b1' | b2' | g0 | g2 | bt0+bt2]
    meta_pad = pv_ref[0:B, :]                       # (B, D)
    b_enc = pv_ref[B + 0:B + 1, :]
    b1p = pv_ref[B + 1:B + 2, :]
    b2p = pv_ref[B + 2:B + 3, :]
    g0 = pv_ref[B + 3:B + 4, :]
    g2 = pv_ref[B + 4:B + 5, :]
    btsum = pv_ref[B + 5:B + 6, :]

    # weights stacked on sublanes at vreg-aligned offsets 0 / D / 2D
    w_enc = w_ref[0:D, :]          # (D, D), rows md..D-1 are zero padding
    w1 = w_ref[D:2 * D, :]         # g0 pre-folded into rows
    w2 = w_ref[2 * D:3 * D, :]     # g1 pre-folded into rows

    # constant slab: block-diag one-hot scatter on top, block-diag expand
    # selector (lanes 0..B-1, rest zero) stacked below it.
    scat = cs_ref[0:BT, :]                          # (B*T, B*L)
    sel = cs_ref[BT:BT + BL, 0:B]                   # (B*L, B)

    # expand (outer product with expand_w) as one block-diag selector matmul:
    #   tok row (b, l) = expand_w[l] * meta[b, :]
    tok = jnp.dot(sel, meta_pad, preferred_element_type=jnp.float32)       # (B*L, D)
    pre0 = jnp.dot(tok, w_enc, preferred_element_type=jnp.float32) + b_enc
    n0 = _ln_rows(jnp.maximum(pre0, 0.0))

    # ResNormLayer with LN affines folded into w1/w2/b1p/b2p
    pre1 = jnp.dot(n0, w1, preferred_element_type=jnp.float32) + b1p
    n1 = _ln_rows(jnp.maximum(pre1, 0.0))
    pre2 = jnp.dot(n1, w2, preferred_element_type=jnp.float32) + b2p
    n2 = _ln_rows(jnp.maximum(pre2, 0.0))

    # residual add with the deferred affines: h + y = n0*g0 + n2*g2 + (bt0+bt2)
    out_h = n0 * g0 + n2 * g2 + btsum                                      # (B*L, D)

    # scatter every batch's border tokens into the flattened pixel axis with a
    # single block-diagonal matmul, then residual add + store in x's layout.
    prompt = jnp.dot(scat, out_h, preferred_element_type=jnp.float32)      # (B*T, D)
    out_ref[...] = x_ref[...] + prompt


def _make_scatter_blockdiag(image_size, batch):
    """Block-diag one-hot (B*T, B*L): flat pixel (b, t) <- encoder token (b, l)."""
    S = image_size
    T = S * S
    L = 4 * S - 4
    m = np.zeros((T, L), dtype=np.float32)
    for j in range(S):
        m[j, j] = 1.0                                        # pad_up:    pixel (0, j)
        m[(S - 1) * S + j, S + j] = 1.0                      # pad_down:  pixel (S-1, j)
    for i in range(1, S - 1):
        m[i * S, 2 * S + (i - 1)] = 1.0                      # pad_left:  pixel (i, 0)
        m[i * S + (S - 1), 2 * S + (S - 2) + (i - 1)] = 1.0  # pad_right: pixel (i, S-1)
    blk = np.zeros((batch * T, batch * L), dtype=np.float32)
    for b in range(batch):
        blk[b * T:(b + 1) * T, b * L:(b + 1) * L] = m
    return blk


def pack_params(params, image_size, batch, embed_dim):
    """One-time parameter packing (outside the per-call path).

    Returns the constant slabs the kernel consumes:
      w    (3D, D)          : [W_enc zero-padded to K=D ; g0*W1 ; g1*W2]
      pvec (6, D)           : [b_enc ; bt0@W1+b1 ; bt1@W2+b2 ; g0 ; g2 ; bt0+bt2]
      cs   (B*T+B*L, B*L)   : [block-diag scatter ; block-diag expand selector]
    """
    D = embed_dim
    md = params["w_enc"].shape[0]
    S = image_size
    L = 4 * S - 4

    w_enc_pad = jnp.zeros((D, D), jnp.float32).at[:md, :].set(params["w_enc"])
    w1f = params["g0"].reshape(D, 1) * params["w1"]          # fold LN0 gain into W1 rows
    w2f = params["g1"].reshape(D, 1) * params["w2"]          # fold LN1 gain into W2 rows
    w = jnp.concatenate([w_enc_pad, w1f, w2f], axis=0)       # (3D, D)

    b1p = params["bt0"] @ params["w1"] + params["b1"]
    b2p = params["bt1"] @ params["w2"] + params["b2"]
    bt_sum = params["bt0"] + params["bt2"]
    pvec = jnp.concatenate([params["b_enc"], b1p, b2p,
                            params["g0"], params["g2"], bt_sum], axis=0)   # (6, D)

    scat = jnp.asarray(_make_scatter_blockdiag(S, batch))                  # (B*T, B*L)
    sel = jnp.kron(jnp.eye(batch, dtype=jnp.float32),
                   params["expand_w"].astype(jnp.float32))                 # (B*L, B)
    sel_pad = jnp.zeros((batch * L, batch * L), jnp.float32).at[:, :batch].set(sel)
    cs = jnp.concatenate([scat, sel_pad], axis=0)                          # (B*T+B*L, B*L)

    return {"w": w, "pvec": pvec, "cs": cs}


def inside_pad_meta(x, meta, packed):
    B, T, D = x.shape
    md = meta.shape[-1]
    BL = packed["cs"].shape[1]
    assert packed["cs"].shape[0] == B * T + BL

    x2 = x.reshape(B * T, D)                                    # metadata-only reshape
    meta_pad = jnp.pad(meta.astype(jnp.float32), ((0, 0), (0, D - md)))
    pv = jnp.concatenate([meta_pad, packed["pvec"]], axis=0)    # (B+6, D)

    def full(shape):
        return pl.BlockSpec(shape, lambda i: (0,) * len(shape))

    grid_spec = pltpu.PrefetchScalarGridSpec(
        num_scalar_prefetch=0,
        grid=(1,),                       # single step: no per-batch grid overhead
        in_specs=[full(x2.shape), full(pv.shape),
                  full(packed["w"].shape), full(packed["cs"].shape)],
        out_specs=full((B * T, D)),
    )

    flops = (2 * BL * B * D              # expand selector matmul
             + 3 * 2 * BL * D * D        # W_enc(pad), W1, W2
             + 2 * B * T * BL * D)       # border scatter matmul
    bytes_accessed = 4 * (2 * B * T * D + (B + 6) * D + 3 * D * D
                          + (B * T + BL) * BL)

    out = pl.pallas_call(
        inside_pad_meta_kernel,
        out_shape=jax.ShapeDtypeStruct((B * T, D), jnp.float32),
        grid_spec=grid_spec,
        input_output_aliases={0: 0},     # output reuses x's buffer when donatable
        compiler_params=pltpu.CompilerParams(
            dimension_semantics=("arbitrary",)),
        cost_estimate=pl.CostEstimate(flops=int(flops), transcendentals=3 * BL,
                                      bytes_accessed=int(bytes_accessed)),
    )(x2, pv, packed["w"], packed["cs"])

    return out.reshape(B, T, D)


# ----------------------------- reference ------------------------------------
def _layer_norm_ref(v, g, b, eps=1e-5):
    mu = jnp.mean(v, axis=-1, keepdims=True)
    var = jnp.mean((v - mu) ** 2, axis=-1, keepdims=True)
    return (v - mu) * lax.rsqrt(var + eps) * g + b


def reference(x, meta, params, image_size):
    """Pure-JAX reference matching the PyTorch forward."""
    S = image_size
    T = S * S
    L = 4 * S - 4
    base = S - 2
    scat = np.zeros((T, L), dtype=np.float32)
    for i in range(S):
        for j in range(S):
            t = i * S + j
            if i == 0:
                pos = j
            elif i == S - 1:
                pos = S + j
            elif j == 0:
                pos = 2 * S + (i - 1)
            elif j == S - 1:
                pos = 2 * S + base + (i - 1)
            else:
                continue
            scat[t, pos] = 1.0
    scat = jnp.asarray(scat)

    expanded = meta[:, :, None] * params["expand_w"][:, 0][None, None, :]
    tok = jnp.transpose(expanded, (0, 2, 1))                     # (B, L, md)
    h = jnp.maximum(tok @ params["w_enc"] + params["b_enc"], 0.0)
    h = _layer_norm_ref(h, params["g0"], params["bt0"])
    y = jnp.maximum(h @ params["w1"] + params["b1"], 0.0)
    y = _layer_norm_ref(y, params["g1"], params["bt1"])
    y = jnp.maximum(y @ params["w2"] + params["b2"], 0.0)
    y = _layer_norm_ref(y, params["g2"], params["bt2"])
    h = h + y
    prompt = jnp.einsum("tl,bld->btd", scat, h)
    return x + prompt


if __name__ == "__main__":
    image_size = 8          # num_token = 64
    meta_dim = 4
    embed_dim = 16          # == dim of x (required by the module's semantics)
    B = 2
    T = image_size * image_size
    L = 4 * image_size - 4

    key = jax.random.PRNGKey(0)
    keys = jax.random.split(key, 16)
    params = {
        "expand_w": jax.random.normal(keys[0], (L, 1), jnp.float32) * 0.5,
        "w_enc": jax.random.normal(keys[1], (meta_dim, embed_dim), jnp.float32) * 0.3,
        "b_enc": jax.random.normal(keys[2], (1, embed_dim), jnp.float32) * 0.1,
        "g0": 1.0 + 0.1 * jax.random.normal(keys[9], (1, embed_dim), jnp.float32),
        "bt0": 0.1 * jax.random.normal(keys[10], (1, embed_dim), jnp.float32),
        "w1": jax.random.normal(keys[3], (embed_dim, embed_dim), jnp.float32) * 0.2,
        "b1": jax.random.normal(keys[4], (1, embed_dim), jnp.float32) * 0.1,
        "g1": 1.0 + 0.1 * jax.random.normal(keys[11], (1, embed_dim), jnp.float32),
        "bt1": 0.1 * jax.random.normal(keys[12], (1, embed_dim), jnp.float32),
        "w2": jax.random.normal(keys[5], (embed_dim, embed_dim), jnp.float32) * 0.2,
        "b2": jax.random.normal(keys[6], (1, embed_dim), jnp.float32) * 0.1,
        "g2": 1.0 + 0.1 * jax.random.normal(keys[13], (1, embed_dim), jnp.float32),
        "bt2": 0.1 * jax.random.normal(keys[14], (1, embed_dim), jnp.float32),
    }

    x = jax.random.normal(keys[7], (B, T, embed_dim), jnp.float32)
    meta = jax.random.normal(keys[8], (B, meta_dim), jnp.float32)

    # one-time parameter packing, outside the per-call / per-step path
    packed = pack_params(params, image_size, B, embed_dim)

    run = jax.jit(inside_pad_meta)
    out = jax.block_until_ready(run(x, meta, packed))

    ref = jax.block_until_ready(reference(x, meta, params, image_size))
    assert out.shape == (B, T, embed_dim)
    np.testing.assert_allclose(np.asarray(out), np.asarray(ref),
                               rtol=1e-4, atol=1e-4)
    print("KERNEL_OK")
</pallas_src>

<mosaic_0001>
module attributes {stable_mosaic.version = 11 : i64} {
  func.func @inside_pad_meta_kernel(%arg0: i32, %arg1: memref<128x16xf32, #tpu.memory_space<vmem>>, %arg2: memref<8x16xf32, #tpu.memory_space<vmem>>, %arg3: memref<48x16xf32, #tpu.memory_space<vmem>>, %arg4: memref<184x56xf32, #tpu.memory_space<vmem>>, %arg5: memref<128x16xf32, #tpu.memory_space<vmem>>) attributes {dimension_semantics = [#tpu.dimension_semantics<arbitrary>], iteration_bounds = array<i64: 1>, scalar_prefetch = 0 : i64, scratch_operands = 0 : i64, tpu.core_type = #tpu.core_type<tc>, window_params = [{pipeline_mode = #tpu.pipeline_mode<synchronous>, transform_indices = @transform_0, window_bounds = array<i64: 128, 16>}, {pipeline_mode = #tpu.pipeline_mode<synchronous>, transform_indices = @transform_1, window_bounds = array<i64: 8, 16>}, {pipeline_mode = #tpu.pipeline_mode<synchronous>, transform_indices = @transform_2, window_bounds = array<i64: 48, 16>}, {pipeline_mode = #tpu.pipeline_mode<synchronous>, transform_indices = @transform_3, window_bounds = array<i64: 184, 56>}, {pipeline_mode = #tpu.pipeline_mode<synchronous>, transform_indices = @transform_4, window_bounds = array<i64: 128, 16>}]} {
    %c0 = arith.constant 0 : index
    %c0_0 = arith.constant 0 : index
    %0 = vector.load %arg2[%c0, %c0_0] : memref<8x16xf32, #tpu.memory_space<vmem>>, vector<2x16xf32>
    %c2 = arith.constant 2 : index
    %c0_1 = arith.constant 0 : index
    %1 = vector.load %arg2[%c2, %c0_1] : memref<8x16xf32, #tpu.memory_space<vmem>>, vector<1x16xf32>
    %c3 = arith.constant 3 : index
    %c0_2 = arith.constant 0 : index
    %2 = vector.load %arg2[%c3, %c0_2] : memref<8x16xf32, #tpu.memory_space<vmem>>, vector<1x16xf32>
    %c4 = arith.constant 4 : index
    %c0_3 = arith.constant 0 : index
    %3 = vector.load %arg2[%c4, %c0_3] : memref<8x16xf32, #tpu.memory_space<vmem>>, vector<1x16xf32>
    %c5 = arith.constant 5 : index
    %c0_4 = arith.constant 0 : index
    %4 = vector.load %arg2[%c5, %c0_4] : memref<8x16xf32, #tpu.memory_space<vmem>>, vector<1x16xf32>
    %c6 = arith.constant 6 : index
    %c0_5 = arith.constant 0 : index
    %5 = vector.load %arg2[%c6, %c0_5] : memref<8x16xf32, #tpu.memory_space<vmem>>, vector<1x16xf32>
    %c7 = arith.constant 7 : index
    %c0_6 = arith.constant 0 : index
    %6 = vector.load %arg2[%c7, %c0_6] : memref<8x16xf32, #tpu.memory_space<vmem>>, vector<1x16xf32>
    %c0_7 = arith.constant 0 : index
    %c0_8 = arith.constant 0 : index
    %7 = vector.load %arg3[%c0_7, %c0_8] : memref<48x16xf32, #tpu.memory_space<vmem>>, vector<16x16xf32>
    %c16 = arith.constant 16 : index
    %c0_9 = arith.constant 0 : index
    %8 = vector.load %arg3[%c16, %c0_9] : memref<48x16xf32, #tpu.memory_space<vmem>>, vector<16x16xf32>
    %c32 = arith.constant 32 : index
    %c0_10 = arith.constant 0 : index
    %9 = vector.load %arg3[%c32, %c0_10] : memref<48x16xf32, #tpu.memory_space<vmem>>, vector<16x16xf32>
    %c0_11 = arith.constant 0 : index
    %c0_12 = arith.constant 0 : index
    %10 = vector.load %arg4[%c0_11, %c0_12] : memref<184x56xf32, #tpu.memory_space<vmem>>, vector<128x56xf32>
    %c128 = arith.constant 128 : index
    %c0_13 = arith.constant 0 : index
    %11 = vector.load %arg4[%c128, %c0_13] : memref<184x56xf32, #tpu.memory_space<vmem>>, vector<56x2xf32>
    %cst = arith.constant dense<0.000000e+00> : vector<56x16xf32>
    %12 = tpu.matmul %11, %0, %cst {dimension_numbers = #tpu.dot_dimension_numbers<[1], [0], [0], [1], [0, 0, 1, 1], [], []>} : vector<56x2xf32>, vector<2x16xf32>, vector<56x16xf32> -> vector<56x16xf32>
    %cst_14 = arith.constant dense<0.000000e+00> : vector<56x16xf32>
    %13 = tpu.matmul %12, %7, %cst_14 {dimension_numbers = #tpu.dot_dimension_numbers<[1], [0], [0], [1], [0, 0, 1, 1], [], []>} : vector<56x16xf32>, vector<16x16xf32>, vector<56x16xf32> -> vector<56x16xf32>
    %14 = vector.broadcast %1 : vector<1x16xf32> to vector<56x16xf32>
    %15 = arith.addf %13, %14 : vector<56x16xf32>
    %cst_15 = arith.constant 0.000000e+00 : f32
    %16 = vector.broadcast %cst_15 : f32 to vector<56x16xf32>
    %17 = arith.maximumf %15, %16 : vector<56x16xf32>
    %cst_16 = arith.constant dense<0.000000e+00> : vector<56xf32>
    %18 = vector.multi_reduction <add>, %17, %cst_16 [1] : vector<56x16xf32> to vector<56xf32>
    %19 = vector.shape_cast %18 : vector<56xf32> to vector<56x1xf32>
    %cst_17 = arith.constant 6.250000e-02 : f32
    %20 = vector.broadcast %cst_17 : f32 to vector<56x1xf32>
    %21 = arith.mulf %19, %20 : vector<56x1xf32>
    %22 = arith.mulf %17, %17 : vector<56x16xf32>
    %cst_18 = arith.constant dense<0.000000e+00> : vector<56xf32>
    %23 = vector.multi_reduction <add>, %22, %cst_18 [1] : vector<56x16xf32> to vector<56xf32>
    %24 = vector.shape_cast %23 : vector<56xf32> to vector<56x1xf32>
    %cst_19 = arith.constant 6.250000e-02 : f32
    %25 = vector.broadcast %cst_19 : f32 to vector<56x1xf32>
    %26 = arith.mulf %24, %25 : vector<56x1xf32>
    %27 = arith.mulf %21, %21 : vector<56x1xf32>
    %28 = arith.subf %26, %27 : vector<56x1xf32>
    %cst_20 = arith.constant 0.000000e+00 : f32
    %29 = vector.broadcast %cst_20 : f32 to vector<56x1xf32>
    %30 = arith.maximumf %28, %29 : vector<56x1xf32>
    %31 = vector.broadcast %21 : vector<56x1xf32> to vector<56x16xf32>
    %32 = arith.subf %17, %31 : vector<56x16xf32>
    %cst_21 = arith.constant 9.99999974E-6 : f32
    %33 = vector.broadcast %cst_21 : f32 to vector<56x1xf32>
    %34 = arith.addf %30, %33 : vector<56x1xf32>
    %35 = math.rsqrt %34 : vector<56x1xf32>
    %36 = vector.broadcast %35 : vector<56x1xf32> to vector<56x16xf32>
    %37 = arith.mulf %32, %36 : vector<56x16xf32>
    %cst_22 = arith.constant dense<0.000000e+00> : vector<56x16xf32>
    %38 = tpu.matmul %37, %8, %cst_22 {dimension_numbers = #tpu.dot_dimension_numbers<[1], [0], [0], [1], [0, 0, 1, 1], [], []>} : vector<56x16xf32>, vector<16x16xf32>, vector<56x16xf32> -> vector<56x16xf32>
    %39 = vector.broadcast %2 : vector<1x16xf32> to vector<56x16xf32>
    %40 = arith.addf %38, %39 : vector<56x16xf32>
    %cst_23 = arith.constant 0.000000e+00 : f32
    %41 = vector.broadcast %cst_23 : f32 to vector<56x16xf32>
    %42 = arith.maximumf %40, %41 : vector<56x16xf32>
    %cst_24 = arith.constant dense<0.000000e+00> : vector<56xf32>
    %43 = vector.multi_reduction <add>, %42, %cst_24 [1] : vector<56x16xf32> to vector<56xf32>
    %44 = vector.shape_cast %43 : vector<56xf32> to vector<56x1xf32>
    %cst_25 = arith.constant 6.250000e-02 : f32
    %45 = vector.broadcast %cst_25 : f32 to vector<56x1xf32>
    %46 = arith.mulf %44, %45 : vector<56x1xf32>
    %47 = arith.mulf %42, %42 : vector<56x16xf32>
    %cst_26 = arith.constant dense<0.000000e+00> : vector<56xf32>
    %48 = vector.multi_reduction <add>, %47, %cst_26 [1] : vector<56x16xf32> to vector<56xf32>
    %49 = vector.shape_cast %48 : vector<56xf32> to vector<56x1xf32>
    %cst_27 = arith.constant 6.250000e-02 : f32
    %50 = vector.broadcast %cst_27 : f32 to vector<56x1xf32>
    %51 = arith.mulf %49, %50 : vector<56x1xf32>
    %52 = arith.mulf %46, %46 : vector<56x1xf32>
    %53 = arith.subf %51, %52 : vector<56x1xf32>
    %cst_28 = arith.constant 0.000000e+00 : f32
    %54 = vector.broadcast %cst_28 : f32 to vector<56x1xf32>
    %55 = arith.maximumf %53, %54 : vector<56x1xf32>
    %56 = vector.broadcast %46 : vector<56x1xf32> to vector<56x16xf32>
    %57 = arith.subf %42, %56 : vector<56x16xf32>
    %cst_29 = arith.constant 9.99999974E-6 : f32
    %58 = vector.broadcast %cst_29 : f32 to vector<56x1xf32>
    %59 = arith.addf %55, %58 : vector<56x1xf32>
    %60 = math.rsqrt %59 : vector<56x1xf32>
    %61 = vector.broadcast %60 : vector<56x1xf32> to vector<56x16xf32>
    %62 = arith.mulf %57, %61 : vector<56x16xf32>
    %cst_30 = arith.constant dense<0.000000e+00> : vector<56x16xf32>
    %63 = tpu.matmul %62, %9, %cst_30 {dimension_numbers = #tpu.dot_dimension_numbers<[1], [0], [0], [1], [0, 0, 1, 1], [], []>} : vector<56x16xf32>, vector<16x16xf32>, vector<56x16xf32> -> vector<56x16xf32>
    %64 = vector.broadcast %3 : vector<1x16xf32> to vector<56x16xf32>
    %65 = arith.addf %63, %64 : vector<56x16xf32>
    %cst_31 = arith.constant 0.000000e+00 : f32
    %66 = vector.broadcast %cst_31 : f32 to vector<56x16xf32>
    %67 = arith.maximumf %65, %66 : vector<56x16xf32>
    %cst_32 = arith.constant dense<0.000000e+00> : vector<56xf32>
    %68 = vector.multi_reduction <add>, %67, %cst_32 [1] : vector<56x16xf32> to vector<56xf32>
    %69 = vector.shape_cast %68 : vector<56xf32> to vector<56x1xf32>
    %cst_33 = arith.constant 6.250000e-02 : f32
    %70 = vector.broadcast %cst_33 : f32 to vector<56x1xf32>
    %71 = arith.mulf %69, %70 : vector<56x1xf32>
    %72 = arith.mulf %67, %67 : vector<56x16xf32>
    %cst_34 = arith.constant dense<0.000000e+00> : vector<56xf32>
    %73 = vector.multi_reduction <add>, %72, %cst_34 [1] : vector<56x16xf32> to vector<56xf32>
    %74 = vector.shape_cast %73 : vector<56xf32> to vector<56x1xf32>
    %cst_35 = arith.constant 6.250000e-02 : f32
    %75 = vector.broadcast %cst_35 : f32 to vector<56x1xf32>
    %76 = arith.mulf %74, %75 : vector<56x1xf32>
    %77 = arith.mulf %71, %71 : vector<56x1xf32>
    %78 = arith.subf %76, %77 : vector<56x1xf32>
    %cst_36 = arith.constant 0.000000e+00 : f32
    %79 = vector.broadcast %cst_36 : f32 to vector<56x1xf32>
    %80 = arith.maximumf %78, %79 : vector<56x1xf32>
    %81 = vector.broadcast %71 : vector<56x1xf32> to vector<56x16xf32>
    %82 = arith.subf %67, %81 : vector<56x16xf32>
    %cst_37 = arith.constant 9.99999974E-6 : f32
    %83 = vector.broadcast %cst_37 : f32 to vector<56x1xf32>
    %84 = arith.addf %80, %83 : vector<56x1xf32>
    %85 = math.rsqrt %84 : vector<56x1xf32>
    %86 = vector.broadcast %85 : vector<56x1xf32> to vector<56x16xf32>
    %87 = arith.mulf %82, %86 : vector<56x16xf32>
    %88 = vector.broadcast %4 : vector<1x16xf32> to vector<56x16xf32>
    %89 = arith.mulf %37, %88 : vector<56x16xf32>
    %90 = vector.broadcast %5 : vector<1x16xf32> to vector<56x16xf32>
    %91 = arith.mulf %87, %90 : vector<56x16xf32>
    %92 = arith.addf %89, %91 : vector<56x16xf32>
    %93 = vector.broadcast %6 : vector<1x16xf32> to vector<56x16xf32>
    %94 = arith.addf %92, %93 : vector<56x16xf32>
    %cst_38 = arith.constant dense<0.000000e+00> : vector<128x16xf32>
    %95 = tpu.matmul %10, %94, %cst_38 {dimension_numbers = #tpu.dot_dimension_numbers<[1], [0], [0], [1], [0, 0, 1, 1], [], []>} : vector<128x56xf32>, vector<56x16xf32>, vector<128x16xf32> -> vector<128x16xf32>
    %c0_39 = arith.constant 0 : index
    %c0_40 = arith.constant 0 : index
    %96 = vector.load %arg1[%c0_39, %c0_40] : memref<128x16xf32, #tpu.memory_space<vmem>>, vector<128x16xf32>
    %97 = arith.addf %96, %95 : vector<128x16xf32>
    %c0_41 = arith.constant 0 : index
    %c0_42 = arith.constant 0 : index
    %98 = vector.load %arg5[%c0_41, %c0_42] : memref<128x16xf32, #tpu.memory_space<vmem>>, vector<128x16xf32>
    tpu.vector_store %arg5[%c0_41, %c0_42], %97 {strides = array<i32>} : memref<128x16xf32, #tpu.memory_space<vmem>>, vector<128x16xf32>,
    return
  }
  func.func @transform_0(%arg0: i32) -> (i32, i32) {
    %c0_i32 = arith.constant 0 : i32
    %c0_i32_0 = arith.constant 0 : i32
    %c0_i32_1 = arith.constant 0 : i32
    return %c0_i32, %c0_i32_0 : i32, i32
  }
  func.func @transform_1(%arg0: i32) -> (i32, i32) {
    %c0_i32 = arith.constant 0 : i32
    %c0_i32_0 = arith.constant 0 : i32
    %c0_i32_1 = arith.constant 0 : i32
    return %c0_i32, %c0_i32_0 : i32, i32
  }
  func.func @transform_2(%arg0: i32) -> (i32, i32) {
    %c0_i32 = arith.constant 0 : i32
    %c0_i32_0 = arith.constant 0 : i32
    %c0_i32_1 = arith.constant 0 : i32
    return %c0_i32, %c0_i32_0 : i32, i32
  }
  func.func @transform_3(%arg0: i32) -> (i32, i32) {
    %c0_i32 = arith.constant 0 : i32
    %c0_i32_0 = arith.constant 0 : i32
    %c0_i32_1 = arith.constant 0 : i32
    return %c0_i32, %c0_i32_0 : i32, i32
  }
  func.func @transform_4(%arg0: i32) -> (i32, i32) {
    %c0_i32 = arith.constant 0 : i32
    %c0_i32_0 = arith.constant 0 : i32
    %c0_i32_1 = arith.constant 0 : i32
    return %c0_i32, %c0_i32_0 : i32, i32
  }
}

</mosaic_0001>

<llo_original>
// kernel: inside_pad_meta.1
$region0: #{inside_pad_meta.1}
  #allocation0 [shape = 'u32[]', space=smem, size = 0x4, offset = 0x4, fixed_abs, tag = 'smem constant byte address 0x4 - core index']
  #allocation1 [shape = 'u32[144,128]{1,0:T(1,128)}', space=vmem, size = 0x12000, scoped, tag = 'internal scratch']
  %s0 = inlined_call_operand.vmem [shape: f32[128,16], index: 0, kind: input, shape index: {}, may-alias: {0,4}]
  %s1 = inlined_call_operand.vmem [shape: f32[8,16], index: 1, kind: input, shape index: {}]
  %s2 = inlined_call_operand.vmem [shape: f32[48,16], index: 2, kind: input, shape index: {}]
  %s3 = inlined_call_operand.vmem [shape: f32[184,56], index: 3, kind: input, shape index: {}]
  %s4 = inlined_call_operand.vmem [shape: f32[128,16], index: 4, kind: output, shape index: {}, may-alias: {0,4}]
  %s5 = sld [smem:[#allocation0]]
  $region26: #{inside_pad_meta.1} parent=0
    _
  %s7 = ssub.s32 1, %s5
  %s8 = scalar_select 0, %s7, %s5
  // Predicated region
  $region2: #{inside_pad_meta.1} parent=0 // pred_check
    _
  $region3: #{inside_pad_meta.1} parent=0 // pred_check_branch
    %10 = sbr.rel (0) target = $region5
  $region4: #{inside_pad_meta.1} parent=0 // pred_region
    _
  $region5: #{inside_pad_meta.1} parent=0 // pred_fallthru
    _
  // Predicated region
  $region6: #{inside_pad_meta.1} parent=0 // pred_check
    _
  $region7: #{inside_pad_meta.1} parent=0 // pred_check_branch
    %12 = sbr.rel (0) target = $region9
  $region8: #{inside_pad_meta.1} parent=0 // pred_region
    _
  $region9: #{inside_pad_meta.1} parent=0 // pred_fallthru
    _
  // Predicated region
  $region10: #{inside_pad_meta.1} parent=0 // pred_check
    _
  $region11: #{inside_pad_meta.1} parent=0 // pred_check_branch
    %14 = sbr.rel (0) target = $region13
  $region12: #{inside_pad_meta.1} parent=0 // pred_region
    _
  $region13: #{inside_pad_meta.1} parent=0 // pred_fallthru
    _
  // Predicated region
  $region14: #{inside_pad_meta.1} parent=0 // pred_check
    _
  $region15: #{inside_pad_meta.1} parent=0 // pred_check_branch
    %16 = sbr.rel (0) target = $region17
  $region16: #{inside_pad_meta.1} parent=0 // pred_region
    _
  $region17: #{inside_pad_meta.1} parent=0 // pred_fallthru
    _
  %v17 = vld [vmem:[%s1] sm:$0x3]
  %v18 = vld [vmem:[%s1 + $0x2] sm:$0x1]
  %v19 = vld [vmem:[%s1 + $0x3] sm:$0x1]
  %v20 = vld [vmem:[%s1 + $0x4] sm:$0x1]
  %v21 = vld [vmem:[%s1 + $0x5] sm:$0x1]
  %v22 = vld [vmem:[%s1 + $0x6] sm:$0x1]
  %v23 = vld [vmem:[%s1 + $0x7] sm:$0x1]
  %v24 = vld [vmem:[%s2] sm:$0xff]
  %v25 = vld [vmem:[%s2 + $0x8] sm:$0xff]
  %v26 = vld [vmem:[%s2 + $0x10] sm:$0xff]
  %v27 = vld [vmem:[%s2 + $0x18] sm:$0xff]
  %v28 = vld [vmem:[%s2 + $0x20] sm:$0xff]
  %v29 = vld [vmem:[%s2 + $0x28] sm:$0xff]
  %v30 = vld [vmem:[%s3] sm:$0xff]
  %v31 = vld [vmem:[%s3 + $0x8] sm:$0xff]
  %v32 = vld [vmem:[%s3 + $0x10] sm:$0xff]
  %v33 = vld [vmem:[%s3 + $0x18] sm:$0xff]
  %v34 = vld [vmem:[%s3 + $0x20] sm:$0xff]
  %v35 = vld [vmem:[%s3 + $0x28] sm:$0xff]
  %v36 = vld [vmem:[%s3 + $0x30] sm:$0xff]
  %v37 = vld [vmem:[%s3 + $0x38] sm:$0xff]
  %v38 = vld [vmem:[%s3 + $0x40] sm:$0xff]
  %v39 = vld [vmem:[%s3 + $0x48] sm:$0xff]
  %v40 = vld [vmem:[%s3 + $0x50] sm:$0xff]
  %v41 = vld [vmem:[%s3 + $0x58] sm:$0xff]
  %v42 = vld [vmem:[%s3 + $0x60] sm:$0xff]
  %v43 = vld [vmem:[%s3 + $0x68] sm:$0xff]
  %v44 = vld [vmem:[%s3 + $0x70] sm:$0xff]
  %v45 = vld [vmem:[%s3 + $0x78] sm:$0xff]
  %v46 = vld [vmem:[%s3 + $0x80] sm:$0xff]
  %v47 = vld [vmem:[%s3 + $0x88] sm:$0xff]
  %v48 = vld [vmem:[%s3 + $0x90] sm:$0xff]
  %v49 = vld [vmem:[%s3 + $0x98] sm:$0xff]
  %v50 = vld [vmem:[%s3 + $0xa0] sm:$0xff]
  %v51 = vld [vmem:[%s3 + $0xa8] sm:$0xff]
  %v52 = vld [vmem:[%s3 + $0xb0] sm:$0xff]
  %vm53 = vcmask 15360
  %v55 = vsel %vm53, %v46, 0
  %v58 = vsel %vm53, %v47, 0
  %v61 = vsel %vm53, %v48, 0
  %v64 = vsel %vm53, %v49, 0
  %v67 = vsel %vm53, %v50, 0
  %v70 = vsel %vm53, %v51, 0
  %v73 = vsel %vm53, %v52, 0
  %vm75 = vcmask 1041408
  %v77 = vsel %vm75, %v17, 0
  %79 = vmatprep.subr.mxu0 0.0
  %80 = vmatpush1.msra.mxu0 0.0
  %81 = vmatprep.subr.mxu0 0.0
  %82 = vmatpush1.msra.mxu0 0.0
  %83 = vmatprep.subr.mxu0 0.0
  %84 = vmatpush1.msra.mxu0 0.0
  %85 = vmatprep.subr.mxu0 0.0
  %86 = vmatpush1.msra.mxu0 0.0
  %87 = vmatprep.subr.mxu0 0.0
  %88 = vmatpush1.msra.mxu0 0.0
  %89 = vmatprep.subr.mxu0 0.0
  %90 = vmatpush1.msra.mxu0 0.0
  %91 = vmatprep.subr.mxu0 0.0
  %92 = vmatpush1.msra.mxu0 0.0
  %93 = vmatprep.subr.mxu0 0.0
  %94 = vmatpush1.msra.mxu0 0.0
  %95 = vmatprep.subr.mxu0 0.0
  %96 = vmatpush1.msra.mxu0 0.0
  %97 = vmatprep.subr.mxu0 0.0
  %98 = vmatpush1.msra.mxu0 0.0
  %99 = vmatprep.subr.mxu0 0.0
  %100 = vmatpush1.msra.mxu0 0.0
  %101 = vmatprep.subr.mxu0 0.0
  %102 = vmatpush1.msra.mxu0 0.0
  %103 = vmatprep.subr.mxu0 0.0
  %104 = vmatpush1.msra.mxu0 0.0
  %105 = vmatprep.subr.mxu0 0.0
  %106 = vmatpush1.msra.mxu0 0.0
  %107 = vmatprep.subr.mxu0 0.0
  %108 = vmatpush1.msra.mxu0 0.0
  %109 = vmatprep.subr.mxu0 0.0
  %110 = vmatpush1.msra.mxu0 %v77
  %111 = vmatprep.subr.mxu0 0.0
  %112 = vmatpush2.msra.mxu0 0.0
  %113 = vmatprep.subr.mxu0 0.0
  %114 = vmatpush2.msra.mxu0 0.0
  %115 = vmatprep.subr.mxu0 0.0
  %116 = vmatpush2.msra.mxu0 0.0
  %117 = vmatprep.subr.mxu0 0.0
  %118 = vmatpush2.msra.mxu0 0.0
  %119 = vmatprep.subr.mxu0 0.0
  %120 = vmatpush2.msra.mxu0 0.0
  %121 = vmatprep.subr.mxu0 0.0
  %122 = vmatpush2.msra.mxu0 0.0
  %123 = vmatprep.subr.mxu0 0.0
  %124 = vmatpush2.msra.mxu0 0.0
  %125 = vmatprep.subr.mxu0 0.0
  %126 = vmatpush2.msra.mxu0 0.0
  %127 = vmatprep.subr.mxu0 0.0
  %128 = vmatpush2.msra.mxu0 0.0
  %129 = vmatprep.subr.mxu0 0.0
  %130 = vmatpush2.msra.mxu0 0.0
  %131 = vmatprep.subr.mxu0 0.0
  %132 = vmatpush2.msra.mxu0 0.0
  %133 = vmatprep.subr.mxu0 0.0
  %134 = vmatpush2.msra.mxu0 0.0
  %135 = vmatprep.subr.mxu0 0.0
  %136 = vmatpush2.msra.mxu0 0.0
  %137 = vmatprep.subr.mxu0 0.0
  %138 = vmatpush2.msra.mxu0 0.0
  %139 = vmatprep.subr.mxu0 0.0
  %140 = vmatpush2.msra.mxu0 0.0
  %141 = vmatprep.subr.mxu0 0.0
  %142 = vmatpush2.msra.mxu0 0.0
  %143 = vmatprep.mubr.f32.mxu0 0.0
  %144 = vmatmul.mubr.f32.gmra.mxu0 %v55
  %v145 = vpop.f32.mrf.mxu0
  %v146 = vadd.f32 0.0, %v145
  %v147 = vpop.f32.mrf.mxu0
  %148 = vmatprep.mubr.f32.mxu0 0.0
  %149 = vmatmul.mubr.f32.gmra.mxu0 %v58
  %v150 = vpop.f32.mrf.mxu0
  %v151 = vadd.f32 0.0, %v150
  %v152 = vpop.f32.mrf.mxu0
  %153 = vmatprep.mubr.f32.mxu0 0.0
  %154 = vmatmul.mubr.f32.gmra.mxu0 %v61
  %v155 = vpop.f32.mrf.mxu0
  %v156 = vadd.f32 0.0, %v155
  %v157 = vpop.f32.mrf.mxu0
  %158 = vmatprep.mubr.f32.mxu0 0.0
  %159 = vmatmul.mubr.f32.gmra.mxu0 %v64
  %v160 = vpop.f32.mrf.mxu0
  %v161 = vadd.f32 0.0, %v160
  %v162 = vpop.f32.mrf.mxu0
  %163 = vmatprep.mubr.f32.mxu0 0.0
  %164 = vmatmul.mubr.f32.gmra.mxu0 %v67
  %v165 = vpop.f32.mrf.mxu0
  %v166 = vadd.f32 0.0, %v165
  %v167 = vpop.f32.mrf.mxu0
  %168 = vmatprep.mubr.f32.mxu0 0.0
  %169 = vmatmul.mubr.f32.gmra.mxu0 %v70
  %v170 = vpop.f32.mrf.mxu0
  %v171 = vadd.f32 0.0, %v170
  %v172 = vpop.f32.mrf.mxu0
  %173 = vmatprep.mubr.f32.mxu0 0.0
  %174 = vmatmul.mubr.f32.gmra.mxu0 %v73
  %v175 = vpop.f32.mrf.mxu0
  %v176 = vadd.f32 0.0, %v175
  %v177 = vpop.f32.mrf.mxu0
  %178 = vdwg.mxu0
  %v179 = vlaneseq
  %v180 = vshrl.u32 %v179, 7
  %v181 = vsub.s32 0, %v180
  %v182 = vrot.slane %v18, %v181
  %vm183 = vcmask 130048
  %v185 = vsel %vm183, %v146, 0
  %v188 = vsel %vm183, %v151, 0
  %v191 = vsel %vm183, %v156, 0
  %v194 = vsel %vm183, %v161, 0
  %v197 = vsel %vm183, %v166, 0
  %v200 = vsel %vm183, %v171, 0
  %v203 = vsel %vm183, %v176, 0
  %205 = vmatprep.subr.mxu0 0.0
  %206 = vmatpush1.msra.mxu0 0.0
  %207 = vmatprep.subr.mxu0 0.0
  %208 = vmatpush1.msra.mxu0 0.0
  %209 = vmatprep.subr.mxu0 0.0
  %210 = vmatpush1.msra.mxu0 0.0
  %211 = vmatprep.subr.mxu0 0.0
  %212 = vmatpush1.msra.mxu0 0.0
  %213 = vmatprep.subr.mxu0 0.0
  %214 = vmatpush1.msra.mxu0 0.0
  %215 = vmatprep.subr.mxu0 0.0
  %216 = vmatpush1.msra.mxu0 0.0
  %217 = vmatprep.subr.mxu0 0.0
  %218 = vmatpush1.msra.mxu0 0.0
  %219 = vmatprep.subr.mxu0 0.0
  %220 = vmatpush1.msra.mxu0 0.0
  %221 = vmatprep.subr.mxu0 0.0
  %222 = vmatpush1.msra.mxu0 0.0
  %223 = vmatprep.subr.mxu0 0.0
  %224 = vmatpush1.msra.mxu0 0.0
  %225 = vmatprep.subr.mxu0 0.0
  %226 = vmatpush1.msra.mxu0 0.0
  %227 = vmatprep.subr.mxu0 0.0
  %228 = vmatpush1.msra.mxu0 0.0
  %229 = vmatprep.subr.mxu0 0.0
  %230 = vmatpush1.msra.mxu0 0.0
  %231 = vmatprep.subr.mxu0 0.0
  %232 = vmatpush1.msra.mxu0 0.0
  %233 = vmatprep.subr.mxu0 0.0
  %234 = vmatpush1.msra.mxu0 %v25
  %235 = vmatprep.subr.mxu0 0.0
  %236 = vmatpush1.msra.mxu0 %v24
  %237 = vmatprep.subr.mxu0 0.0
  %238 = vmatpush2.msra.mxu0 0.0
  %239 = vmatprep.subr.mxu0 0.0
  %240 = vmatpush2.msra.mxu0 0.0
  %241 = vmatprep.subr.mxu0 0.0
  %242 = vmatpush2.msra.mxu0 0.0
  %243 = vmatprep.subr.mxu0 0.0
  %244 = vmatpush2.msra.mxu0 0.0
  %245 = vmatprep.subr.mxu0 0.0
  %246 = vmatpush2.msra.mxu0 0.0
  %247 = vmatprep.subr.mxu0 0.0
  %248 = vmatpush2.msra.mxu0 0.0
  %249 = vmatprep.subr.mxu0 0.0
  %250 = vmatpush2.msra.mxu0 0.0
  %251 = vmatprep.subr.mxu0 0.0
  %252 = vmatpush2.msra.mxu0 0.0
  %253 = vmatprep.subr.mxu0 0.0
  %254 = vmatpush2.msra.mxu0 0.0
  %255 = vmatprep.subr.mxu0 0.0
  %256 = vmatpush2.msra.mxu0 0.0
  %257 = vmatprep.subr.mxu0 0.0
  %258 = vmatpush2.msra.mxu0 0.0
  %259 = vmatprep.subr.mxu0 0.0
  %260 = vmatpush2.msra.mxu0 0.0
  %261 = vmatprep.subr.mxu0 0.0
  %262 = vmatpush2.msra.mxu0 0.0
  %263 = vmatprep.subr.mxu0 0.0
  %264 = vmatpush2.msra.mxu0 0.0
  %265 = vmatprep.subr.mxu0 0.0
  %266 = vmatpush2.msra.mxu0 0.0
  %267 = vmatprep.subr.mxu0 0.0
  %268 = vmatpush2.msra.mxu0 0.0
  %269 = vmatprep.mubr.f32.mxu0 0.0
  %270 = vmatmul.mubr.f32.gmra.mxu0 %v185
  %v271 = vpop.f32.mrf.mxu0
  %v272 = vadd.f32 %v182, %v271
  %v273 = vpop.f32.mrf.mxu0
  %274 = vmatprep.mubr.f32.mxu0 0.0
  %275 = vmatmul.mubr.f32.gmra.mxu0 %v188
  %v276 = vpop.f32.mrf.mxu0
  %v277 = vadd.f32 %v182, %v276
  %v278 = vpop.f32.mrf.mxu0
  %279 = vmatprep.mubr.f32.mxu0 0.0
  %280 = vmatmul.mubr.f32.gmra.mxu0 %v191
  %v281 = vpop.f32.mrf.mxu0
  %v282 = vadd.f32 %v182, %v281
  %v283 = vpop.f32.mrf.mxu0
  %284 = vmatprep.mubr.f32.mxu0 0.0
  %285 = vmatmul.mubr.f32.gmra.mxu0 %v194
  %v286 = vpop.f32.mrf.mxu0
  %v287 = vadd.f32 %v182, %v286
  %v288 = vpop.f32.mrf.mxu0
  %289 = vmatprep.mubr.f32.mxu0 0.0
  %290 = vmatmul.mubr.f32.gmra.mxu0 %v197
  %v291 = vpop.f32.mrf.mxu0
  %v292 = vadd.f32 %v182, %v291
  %v293 = vpop.f32.mrf.mxu0
  %294 = vmatprep.mubr.f32.mxu0 0.0
  %295 = vmatmul.mubr.f32.gmra.mxu0 %v200
  %v296 = vpop.f32.mrf.mxu0
  %v297 = vadd.f32 %v182, %v296
  %v298 = vpop.f32.mrf.mxu0
  %299 = vmatprep.mubr.f32.mxu0 0.0
  %300 = vmatmul.mubr.f32.gmra.mxu0 %v203
  %v301 = vpop.f32.mrf.mxu0
  %v302 = vadd.f32 %v182, %v301
  %v303 = vpop.f32.mrf.mxu0
  %304 = vdwg.mxu0
  %v305 = vmax.f32 %v272, 0.0
  %v306 = vmax.f32 %v277, 0.0
  %v307 = vmax.f32 %v282, 0.0
  %v308 = vmax.f32 %v287, 0.0
  %v309 = vmax.f32 %v292, 0.0
  %v310 = vmax.f32 %v297, 0.0
  %v311 = vmax.f32 %v302, 0.0
  %v312 = vsel %vm183, %v305, 0.0
  %313 = vadd.xlane.f32.xlu0 %v312
  %v314 = vpop.xlane.xlu0 %313
  %v315 = vsel %vm183, %v306, 0.0
  %316 = vadd.xlane.f32.xlu0 %v315
  %v317 = vpop.xlane.xlu0 %316
  %v318 = vsel %vm183, %v307, 0.0
  %319 = vadd.xlane.f32.xlu0 %v318
  %v320 = vpop.xlane.xlu0 %319
  %v321 = vsel %vm183, %v308, 0.0
  %322 = vadd.xlane.f32.xlu0 %v321
  %v323 = vpop.xlane.xlu0 %322
  %v324 = vsel %vm183, %v309, 0.0
  %325 = vadd.xlane.f32.xlu0 %v324
  %v326 = vpop.xlane.xlu0 %325
  %v327 = vsel %vm183, %v310, 0.0
  %328 = vadd.xlane.f32.xlu0 %v327
  %v329 = vpop.xlane.xlu0 %328
  %v330 = vsel %vm183, %v311, 0.0
  %331 = vadd.xlane.f32.xlu0 %v330
  %v332 = vpop.xlane.xlu0 %331
  %v333 = vmul.f32 %v314, 0.0625
  %v334 = vmul.f32 %v317, 0.0625
  %v335 = vmul.f32 %v320, 0.0625
  %v336 = vmul.f32 %v323, 0.0625
  %v337 = vmul.f32 %v326, 0.0625
  %v338 = vmul.f32 %v329, 0.0625
  %v339 = vmul.f32 %v332, 0.0625
  %v340 = vmul.f32 %v305, %v305
  %v341 = vmul.f32 %v306, %v306
  %v342 = vmul.f32 %v307, %v307
  %v343 = vmul.f32 %v308, %v308
  %v344 = vmul.f32 %v309, %v309
  %v345 = vmul.f32 %v310, %v310
  %v346 = vmul.f32 %v311, %v311
  %v347 = vsel %vm183, %v340, 0.0
  %348 = vadd.xlane.f32.xlu0 %v347
  %v349 = vpop.xlane.xlu0 %348
  %v350 = vsel %vm183, %v341, 0.0
  %351 = vadd.xlane.f32.xlu0 %v350
  %v352 = vpop.xlane.xlu0 %351
  %v353 = vsel %vm183, %v342, 0.0
  %354 = vadd.xlane.f32.xlu0 %v353
  %v355 = vpop.xlane.xlu0 %354
  %v356 = vsel %vm183, %v343, 0.0
  %357 = vadd.xlane.f32.xlu0 %v356
  %v358 = vpop.xlane.xlu0 %357
  %v359 = vsel %vm183, %v344, 0.0
  %360 = vadd.xlane.f32.xlu0 %v359
  %v361 = vpop.xlane.xlu0 %360
  %v362 = vsel %vm183, %v345, 0.0
  %363 = vadd.xlane.f32.xlu0 %v362
  %v364 = vpop.xlane.xlu0 %363
  %v365 = vsel %vm183, %v346, 0.0
  %366 = vadd.xlane.f32.xlu0 %v365
  %v367 = vpop.xlane.xlu0 %366
  %v368 = vmul.f32 %v349, 0.0625
  %v369 = vmul.f32 %v352, 0.0625
  %v370 = vmul.f32 %v355, 0.0625
  %v371 = vmul.f32 %v358, 0.0625
  %v372 = vmul.f32 %v361, 0.0625
  %v373 = vmul.f32 %v364, 0.0625
  %v374 = vmul.f32 %v367, 0.0625
  %v375 = vmul.f32 %v333, %v333
  %v376 = vmul.f32 %v334, %v334
  %v377 = vmul.f32 %v335, %v335
  %v378 = vmul.f32 %v336, %v336
  %v379 = vmul.f32 %v337, %v337
  %v380 = vmul.f32 %v338, %v338
  %v381 = vmul.f32 %v339, %v339
  %v382 = vsub.f32 %v368, %v375
  %v383 = vsub.f32 %v369, %v376
  %v384 = vsub.f32 %v370, %v377
  %v385 = vsub.f32 %v371, %v378
  %v386 = vsub.f32 %v372, %v379
  %v387 = vsub.f32 %v373, %v380
  %v388 = vsub.f32 %v374, %v381
  %v389 = vmax.f32 %v382, 0.0
  %v390 = vmax.f32 %v383, 0.0
  %v391 = vmax.f32 %v384, 0.0
  %v392 = vmax.f32 %v385, 0.0
  %v393 = vmax.f32 %v386, 0.0
  %v394 = vmax.f32 %v387, 0.0
  %v395 = vmax.f32 %v388, 0.0
  %v396 = vsub.f32 %v305, %v333
  %v397 = vsub.f32 %v306, %v334
  %v398 = vsub.f32 %v307, %v335
  %v399 = vsub.f32 %v308, %v336
  %v400 = vsub.f32 %v309, %v337
  %v401 = vsub.f32 %v310, %v338
  %v402 = vsub.f32 %v311, %v339
  %v403 = vadd.f32 %v389, 1e-05
  %v404 = vadd.f32 %v390, 1e-05
  %v405 = vadd.f32 %v391, 1e-05
  %v406 = vadd.f32 %v392, 1e-05
  %v407 = vadd.f32 %v393, 1e-05
  %v408 = vadd.f32 %v394, 1e-05
  %v409 = vadd.f32 %v395, 1e-05
  %v410 = vrsqrt.pop %v403
  %v411 = vrsqrt.pop %v404
  %v412 = vrsqrt.pop %v405
  %v413 = vrsqrt.pop %v406
  %v414 = vrsqrt.pop %v407
  %v415 = vrsqrt.pop %v408
  %v416 = vrsqrt.pop %v409
  %v417 = vmul.f32 %v396, %v410
  %v418 = vmul.f32 %v397, %v411
  %v419 = vmul.f32 %v398, %v412
  %v420 = vmul.f32 %v399, %v413
  %v421 = vmul.f32 %v400, %v414
  %v422 = vmul.f32 %v401, %v415
  %v423 = vmul.f32 %v402, %v416
  %v424 = vlaneseq
  %v425 = vshrl.u32 %v424, 7
  %v426 = vsub.s32 0, %v425
  %v427 = vrot.slane %v19, %v426
  %v429 = vsel %vm183, %v417, 0
  %v432 = vsel %vm183, %v418, 0
  %v435 = vsel %vm183, %v419, 0
  %v438 = vsel %vm183, %v420, 0
  %v441 = vsel %vm183, %v421, 0
  %v444 = vsel %vm183, %v422, 0
  %v447 = vsel %vm183, %v423, 0
  %449 = vmatprep.subr.mxu0 0.0
  %450 = vmatpush1.msra.mxu0 0.0
  %451 = vmatprep.subr.mxu0 0.0
  %452 = vmatpush1.msra.mxu0 0.0
  %453 = vmatprep.subr.mxu0 0.0
  %454 = vmatpush1.msra.mxu0 0.0
  %455 = vmatprep.subr.mxu0 0.0
  %456 = vmatpush1.msra.mxu0 0.0
  %457 = vmatprep.subr.mxu0 0.0
  %458 = vmatpush1.msra.mxu0 0.0
  %459 = vmatprep.subr.mxu0 0.0
  %460 = vmatpush1.msra.mxu0 0.0
  %461 = vmatprep.subr.mxu0 0.0
  %462 = vmatpush1.msra.mxu0 0.0
  %463 = vmatprep.subr.mxu0 0.0
  %464 = vmatpush1.msra.mxu0 0.0
  %465 = vmatprep.subr.mxu0 0.0
  %466 = vmatpush1.msra.mxu0 0.0
  %467 = vmatprep.subr.mxu0 0.0
  %468 = vmatpush1.msra.mxu0 0.0
  %469 = vmatprep.subr.mxu0 0.0
  %470 = vmatpush1.msra.mxu0 0.0
  %471 = vmatprep.subr.mxu0 0.0
  %472 = vmatpush1.msra.mxu0 0.0
  %473 = vmatprep.subr.mxu0 0.0
  %474 = vmatpush1.msra.mxu0 0.0
  %475 = vmatprep.subr.mxu0 0.0
  %476 = vmatpush1.msra.mxu0 0.0
  %477 = vmatprep.subr.mxu0 0.0
  %478 = vmatpush1.msra.mxu0 %v27
  %479 = vmatprep.subr.mxu0 0.0
  %480 = vmatpush1.msra.mxu0 %v26
  %481 = vmatprep.subr.mxu0 0.0
  %482 = vmatpush2.msra.mxu0 0.0
  %483 = vmatprep.subr.mxu0 0.0
  %484 = vmatpush2.msra.mxu0 0.0
  %485 = vmatprep.subr.mxu0 0.0
  %486 = vmatpush2.msra.mxu0 0.0
  %487 = vmatprep.subr.mxu0 0.0
  %488 = vmatpush2.msra.mxu0 0.0
  %489 = vmatprep.subr.mxu0 0.0
  %490 = vmatpush2.msra.mxu0 0.0
  %491 = vmatprep.subr.mxu0 0.0
  %492 = vmatpush2.msra.mxu0 0.0
  %493 = vmatprep.subr.mxu0 0.0
  %494 = vmatpush2.msra.mxu0 0.0
  %495 = vmatprep.subr.mxu0 0.0
  %496 = vmatpush2.msra.mxu0 0.0
  %497 = vmatprep.subr.mxu0 0.0
  %498 = vmatpush2.msra.mxu0 0.0
  %499 = vmatprep.subr.mxu0 0.0
  %500 = vmatpush2.msra.mxu0 0.0
  %501 = vmatprep.subr.mxu0 0.0
  %502 = vmatpush2.msra.mxu0 0.0
  %503 = vmatprep.subr.mxu0 0.0
  %504 = vmatpush2.msra.mxu0 0.0
  %505 = vmatprep.subr.mxu0 0.0
  %506 = vmatpush2.msra.mxu0 0.0
  %507 = vmatprep.subr.mxu0 0.0
  %508 = vmatpush2.msra.mxu0 0.0
  %509 = vmatprep.subr.mxu0 0.0
  %510 = vmatpush2.msra.mxu0 0.0
  %511 = vmatprep.subr.mxu0 0.0
  %512 = vmatpush2.msra.mxu0 0.0
  %513 = vmatprep.mubr.f32.mxu0 0.0
  %514 = vmatmul.mubr.f32.gmra.mxu0 %v429
  %v515 = vpop.f32.mrf.mxu0
  %v516 = vadd.f32 %v427, %v515
  %v517 = vpop.f32.mrf.mxu0
  %518 = vmatprep.mubr.f32.mxu0 0.0
  %519 = vmatmul.mubr.f32.gmra.mxu0 %v432
  %v520 = vpop.f32.mrf.mxu0
  %v521 = vadd.f32 %v427, %v520
  %v522 = vpop.f32.mrf.mxu0
  %523 = vmatprep.mubr.f32.mxu0 0.0
  %524 = vmatmul.mubr.f32.gmra.mxu0 %v435
  %v525 = vpop.f32.mrf.mxu0
  %v526 = vadd.f32 %v427, %v525
  %v527 = vpop.f32.mrf.mxu0
  %528 = vmatprep.mubr.f32.mxu0 0.0
  %529 = vmatmul.mubr.f32.gmra.mxu0 %v438
  %v530 = vpop.f32.mrf.mxu0
  %v531 = vadd.f32 %v427, %v530
  %v532 = vpop.f32.mrf.mxu0
  %533 = vmatprep.mubr.f32.mxu0 0.0
  %534 = vmatmul.mubr.f32.gmra.mxu0 %v441
  %v535 = vpop.f32.mrf.mxu0
  %v536 = vadd.f32 %v427, %v535
  %v537 = vpop.f32.mrf.mxu0
  %538 = vmatprep.mubr.f32.mxu0 0.0
  %539 = vmatmul.mubr.f32.gmra.mxu0 %v444
  %v540 = vpop.f32.mrf.mxu0
  %v541 = vadd.f32 %v427, %v540
  %v542 = vpop.f32.mrf.mxu0
  %543 = vmatprep.mubr.f32.mxu0 0.0
  %544 = vmatmul.mubr.f32.gmra.mxu0 %v447
  %v545 = vpop.f32.mrf.mxu0
  %v546 = vadd.f32 %v427, %v545
  %v547 = vpop.f32.mrf.mxu0
  %548 = vdwg.mxu0
  %v549 = vmax.f32 %v516, 0.0
  %v550 = vmax.f32 %v521, 0.0
  %v551 = vmax.f32 %v526, 0.0
  %v552 = vmax.f32 %v531, 0.0
  %v553 = vmax.f32 %v536, 0.0
  %v554 = vmax.f32 %v541, 0.0
  %v555 = vmax.f32 %v546, 0.0
  %v556 = vsel %vm183, %v549, 0.0
  %557 = vadd.xlane.f32.xlu0 %v556
  %v558 = vpop.xlane.xlu0 %557
  %v559 = vsel %vm183, %v550, 0.0
  %560 = vadd.xlane.f32.xlu0 %v559
  %v561 = vpop.xlane.xlu0 %560
  %v562 = vsel %vm183, %v551, 0.0
  %563 = vadd.xlane.f32.xlu0 %v562
  %v564 = vpop.xlane.xlu0 %563
  %v565 = vsel %vm183, %v552, 0.0
  %566 = vadd.xlane.f32.xlu0 %v565
  %v567 = vpop.xlane.xlu0 %566
  %v568 = vsel %vm183, %v553, 0.0
  %569 = vadd.xlane.f32.xlu0 %v568
  %v570 = vpop.xlane.xlu0 %569
  %v571 = vsel %vm183, %v554, 0.0
  %572 = vadd.xlane.f32.xlu0 %v571
  %v573 = vpop.xlane.xlu0 %572
  %v574 = vsel %vm183, %v555, 0.0
  %575 = vadd.xlane.f32.xlu0 %v574
  %v576 = vpop.xlane.xlu0 %575
  %v577 = vmul.f32 %v558, 0.0625
  %v578 = vmul.f32 %v561, 0.0625
  %v579 = vmul.f32 %v564, 0.0625
  %v580 = vmul.f32 %v567, 0.0625
  %v581 = vmul.f32 %v570, 0.0625
  %v582 = vmul.f32 %v573, 0.0625
  %v583 = vmul.f32 %v576, 0.0625
  %v584 = vmul.f32 %v549, %v549
  %v585 = vmul.f32 %v550, %v550
  %v586 = vmul.f32 %v551, %v551
  %v587 = vmul.f32 %v552, %v552
  %v588 = vmul.f32 %v553, %v553
  %v589 = vmul.f32 %v554, %v554
  %v590 = vmul.f32 %v555, %v555
  %v591 = vsel %vm183, %v584, 0.0
  %592 = vadd.xlane.f32.xlu0 %v591
  %v593 = vpop.xlane.xlu0 %592
  %v594 = vsel %vm183, %v585, 0.0
  %595 = vadd.xlane.f32.xlu0 %v594
  %v596 = vpop.xlane.xlu0 %595
  %v597 = vsel %vm183, %v586, 0.0
  %598 = vadd.xlane.f32.xlu0 %v597
  %v599 = vpop.xlane.xlu0 %598
  %v600 = vsel %vm183, %v587, 0.0
  %601 = vadd.xlane.f32.xlu0 %v600
  %v602 = vpop.xlane.xlu0 %601
  %v603 = vsel %vm183, %v588, 0.0
  %604 = vadd.xlane.f32.xlu0 %v603
  %v605 = vpop.xlane.xlu0 %604
  %v606 = vsel %vm183, %v589, 0.0
  %607 = vadd.xlane.f32.xlu0 %v606
  %v608 = vpop.xlane.xlu0 %607
  %v609 = vsel %vm183, %v590, 0.0
  %610 = vadd.xlane.f32.xlu0 %v609
  %v611 = vpop.xlane.xlu0 %610
  %v612 = vmul.f32 %v593, 0.0625
  %v613 = vmul.f32 %v596, 0.0625
  %v614 = vmul.f32 %v599, 0.0625
  %v615 = vmul.f32 %v602, 0.0625
  %v616 = vmul.f32 %v605, 0.0625
  %v617 = vmul.f32 %v608, 0.0625
  %v618 = vmul.f32 %v611, 0.0625
  %v619 = vmul.f32 %v577, %v577
  %v620 = vmul.f32 %v578, %v578
  %v621 = vmul.f32 %v579, %v579
  %v622 = vmul.f32 %v580, %v580
  %v623 = vmul.f32 %v581, %v581
  %v624 = vmul.f32 %v582, %v582
  %v625 = vmul.f32 %v583, %v583
  %v626 = vsub.f32 %v612, %v619
  %v627 = vsub.f32 %v613, %v620
  %v628 = vsub.f32 %v614, %v621
  %v629 = vsub.f32 %v615, %v622
  %v630 = vsub.f32 %v616, %v623
  %v631 = vsub.f32 %v617, %v624
  %v632 = vsub.f32 %v618, %v625
  %v633 = vmax.f32 %v626, 0.0
  %v634 = vmax.f32 %v627, 0.0
  %v635 = vmax.f32 %v628, 0.0
  %v636 = vmax.f32 %v629, 0.0
  %v637 = vmax.f32 %v630, 0.0
  %v638 = vmax.f32 %v631, 0.0
  %v639 = vmax.f32 %v632, 0.0
  %v640 = vsub.f32 %v549, %v577
  %v641 = vsub.f32 %v550, %v578
  %v642 = vsub.f32 %v551, %v579
  %v643 = vsub.f32 %v552, %v580
  %v644 = vsub.f32 %v553, %v581
  %v645 = vsub.f32 %v554, %v582
  %v646 = vsub.f32 %v555, %v583
  %v647 = vadd.f32 %v633, 1e-05
  %v648 = vadd.f32 %v634, 1e-05
  %v649 = vadd.f32 %v635, 1e-05
  %v650 = vadd.f32 %v636, 1e-05
  %v651 = vadd.f32 %v637, 1e-05
  %v652 = vadd.f32 %v638, 1e-05
  %v653 = vadd.f32 %v639, 1e-05
  %v654 = vrsqrt.pop %v647
  %v655 = vrsqrt.pop %v648
  %v656 = vrsqrt.pop %v649
  %v657 = vrsqrt.pop %v650
  %v658 = vrsqrt.pop %v651
  %v659 = vrsqrt.pop %v652
  %v660 = vrsqrt.pop %v653
  %v661 = vmul.f32 %v640, %v654
  %v662 = vmul.f32 %v641, %v655
  %v663 = vmul.f32 %v642, %v656
  %v664 = vmul.f32 %v643, %v657
  %v665 = vmul.f32 %v644, %v658
  %v666 = vmul.f32 %v645, %v659
  %v667 = vmul.f32 %v646, %v660
  %v668 = vlaneseq
  %v669 = vshrl.u32 %v668, 7
  %v670 = vsub.s32 0, %v669
  %v671 = vrot.slane %v20, %v670
  %v673 = vsel %vm183, %v661, 0
  %v676 = vsel %vm183, %v662, 0
  %v679 = vsel %vm183, %v663, 0
  %v682 = vsel %vm183, %v664, 0
  %v685 = vsel %vm183, %v665, 0
  %v688 = vsel %vm183, %v666, 0
  %v691 = vsel %vm183, %v667, 0
  %693 = vmatprep.subr.mxu0 0.0
  %694 = vmatpush1.msra.mxu0 0.0
  %695 = vmatprep.subr.mxu0 0.0
  %696 = vmatpush1.msra.mxu0 0.0
  %697 = vmatprep.subr.mxu0 0.0
  %698 = vmatpush1.msra.mxu0 0.0
  %699 = vmatprep.subr.mxu0 0.0
  %700 = vmatpush1.msra.mxu0 0.0
  %701 = vmatprep.subr.mxu0 0.0
  %702 = vmatpush1.msra.mxu0 0.0
  %703 = vmatprep.subr.mxu0 0.0
  %704 = vmatpush1.msra.mxu0 0.0
  %705 = vmatprep.subr.mxu0 0.0
  %706 = vmatpush1.msra.mxu0 0.0
  %707 = vmatprep.subr.mxu0 0.0
  %708 = vmatpush1.msra.mxu0 0.0
  %709 = vmatprep.subr.mxu0 0.0
  %710 = vmatpush1.msra.mxu0 0.0
  %711 = vmatprep.subr.mxu0 0.0
  %712 = vmatpush1.msra.mxu0 0.0
  %713 = vmatprep.subr.mxu0 0.0
  %714 = vmatpush1.msra.mxu0 0.0
  %715 = vmatprep.subr.mxu0 0.0
  %716 = vmatpush1.msra.mxu0 0.0
  %717 = vmatprep.subr.mxu0 0.0
  %718 = vmatpush1.msra.mxu0 0.0
  %719 = vmatprep.subr.mxu0 0.0
  %720 = vmatpush1.msra.mxu0 0.0
  %721 = vmatprep.subr.mxu0 0.0
  %722 = vmatpush1.msra.mxu0 %v29
  %723 = vmatprep.subr.mxu0 0.0
  %724 = vmatpush1.msra.mxu0 %v28
  %725 = vmatprep.subr.mxu0 0.0
  %726 = vmatpush2.msra.mxu0 0.0
  %727 = vmatprep.subr.mxu0 0.0
  %728 = vmatpush2.msra.mxu0 0.0
  %729 = vmatprep.subr.mxu0 0.0
  %730 = vmatpush2.msra.mxu0 0.0
  %731 = vmatprep.subr.mxu0 0.0
  %732 = vmatpush2.msra.mxu0 0.0
  %733 = vmatprep.subr.mxu0 0.0
  %734 = vmatpush2.msra.mxu0 0.0
  %735 = vmatprep.subr.mxu0 0.0
  %736 = vmatpush2.msra.mxu0 0.0
  %737 = vmatprep.subr.mxu0 0.0
  %738 = vmatpush2.msra.mxu0 0.0
  %739 = vmatprep.subr.mxu0 0.0
  %740 = vmatpush2.msra.mxu0 0.0
  %741 = vmatprep.subr.mxu0 0.0
  %742 = vmatpush2.msra.mxu0 0.0
  %743 = vmatprep.subr.mxu0 0.0
  %744 = vmatpush2.msra.mxu0 0.0
  %745 = vmatprep.subr.mxu0 0.0
  %746 = vmatpush2.msra.mxu0 0.0
  %747 = vmatprep.subr.mxu0 0.0
  %748 = vmatpush2.msra.mxu0 0.0
  %749 = vmatprep.subr.mxu0 0.0
  %750 = vmatpush2.msra.mxu0 0.0
  %751 = vmatprep.subr.mxu0 0.0
  %752 = vmatpush2.msra.mxu0 0.0
  %753 = vmatprep.subr.mxu0 0.0
  %754 = vmatpush2.msra.mxu0 0.0
  %755 = vmatprep.subr.mxu0 0.0
  %756 = vmatpush2.msra.mxu0 0.0
  %757 = vmatprep.mubr.f32.mxu0 0.0
  %758 = vmatmul.mubr.f32.gmra.mxu0 %v673
  %v759 = vpop.f32.mrf.mxu0
  %v760 = vadd.f32 %v671, %v759
  %v761 = vpop.f32.mrf.mxu0
  %762 = vmatprep.mubr.f32.mxu0 0.0
  %763 = vmatmul.mubr.f32.gmra.mxu0 %v676
  %v764 = vpop.f32.mrf.mxu0
  %v765 = vadd.f32 %v671, %v764
  %v766 = vpop.f32.mrf.mxu0
  %767 = vmatprep.mubr.f32.mxu0 0.0
  %768 = vmatmul.mubr.f32.gmra.mxu0 %v679
  %v769 = vpop.f32.mrf.mxu0
  %v770 = vadd.f32 %v671, %v769
  %v771 = vpop.f32.mrf.mxu0
  %772 = vmatprep.mubr.f32.mxu0 0.0
  %773 = vmatmul.mubr.f32.gmra.mxu0 %v682
  %v774 = vpop.f32.mrf.mxu0
  %v775 = vadd.f32 %v671, %v774
  %v776 = vpop.f32.mrf.mxu0
  %777 = vmatprep.mubr.f32.mxu0 0.0
  %778 = vmatmul.mubr.f32.gmra.mxu0 %v685
  %v779 = vpop.f32.mrf.mxu0
  %v780 = vadd.f32 %v671, %v779
  %v781 = vpop.f32.mrf.mxu0
  %782 = vmatprep.mubr.f32.mxu0 0.0
  %783 = vmatmul.mubr.f32.gmra.mxu0 %v688
  %v784 = vpop.f32.mrf.mxu0
  %v785 = vadd.f32 %v671, %v784
  %v786 = vpop.f32.mrf.mxu0
  %787 = vmatprep.mubr.f32.mxu0 0.0
  %788 = vmatmul.mubr.f32.gmra.mxu0 %v691
  %v789 = vpop.f32.mrf.mxu0
  %v790 = vadd.f32 %v671, %v789
  %v791 = vpop.f32.mrf.mxu0
  %792 = vdwg.mxu0
  %v793 = vmax.f32 %v760, 0.0
  %v794 = vmax.f32 %v765, 0.0
  %v795 = vmax.f32 %v770, 0.0
  %v796 = vmax.f32 %v775, 0.0
  %v797 = vmax.f32 %v780, 0.0
  %v798 = vmax.f32 %v785, 0.0
  %v799 = vmax.f32 %v790, 0.0
  %v800 = vsel %vm183, %v793, 0.0
  %801 = vadd.xlane.f32.xlu0 %v800
  %v802 = vpop.xlane.xlu0 %801
  %v803 = vsel %vm183, %v794, 0.0
  %804 = vadd.xlane.f32.xlu0 %v803
  %v805 = vpop.xlane.xlu0 %804
  %v806 = vsel %vm183, %v795, 0.0
  %807 = vadd.xlane.f32.xlu0 %v806
  %v808 = vpop.xlane.xlu0 %807
  %v809 = vsel %vm183, %v796, 0.0
  %810 = vadd.xlane.f32.xlu0 %v809
  %v811 = vpop.xlane.xlu0 %810
  %v812 = vsel %vm183, %v797, 0.0
  %813 = vadd.xlane.f32.xlu0 %v812
  %v814 = vpop.xlane.xlu0 %813
  %v815 = vsel %vm183, %v798, 0.0
  %816 = vadd.xlane.f32.xlu0 %v815
  %v817 = vpop.xlane.xlu0 %816
  %v818 = vsel %vm183, %v799, 0.0
  %819 = vadd.xlane.f32.xlu0 %v818
  %v820 = vpop.xlane.xlu0 %819
  %v821 = vmul.f32 %v802, 0.0625
  %v822 = vmul.f32 %v805, 0.0625
  %v823 = vmul.f32 %v808, 0.0625
  %v824 = vmul.f32 %v811, 0.0625
  %v825 = vmul.f32 %v814, 0.0625
  %v826 = vmul.f32 %v817, 0.0625
  %v827 = vmul.f32 %v820, 0.0625
  %v828 = vmul.f32 %v793, %v793
  %v829 = vmul.f32 %v794, %v794
  %v830 = vmul.f32 %v795, %v795
  %v831 = vmul.f32 %v796, %v796
  %v832 = vmul.f32 %v797, %v797
  %v833 = vmul.f32 %v798, %v798
  %v834 = vmul.f32 %v799, %v799
  %v835 = vsel %vm183, %v828, 0.0
  %836 = vadd.xlane.f32.xlu0 %v835
  %v837 = vpop.xlane.xlu0 %836
  %v838 = vsel %vm183, %v829, 0.0
  %839 = vadd.xlane.f32.xlu0 %v838
  %v840 = vpop.xlane.xlu0 %839
  %v841 = vsel %vm183, %v830, 0.0
  %842 = vadd.xlane.f32.xlu0 %v841
  %v843 = vpop.xlane.xlu0 %842
  %v844 = vsel %vm183, %v831, 0.0
  %845 = vadd.xlane.f32.xlu0 %v844
  %v846 = vpop.xlane.xlu0 %845
  %v847 = vsel %vm183, %v832, 0.0
  %848 = vadd.xlane.f32.xlu0 %v847
  %v849 = vpop.xlane.xlu0 %848
  %v850 = vsel %vm183, %v833, 0.0
  %851 = vadd.xlane.f32.xlu0 %v850
  %v852 = vpop.xlane.xlu0 %851
  %v853 = vsel %vm183, %v834, 0.0
  %854 = vadd.xlane.f32.xlu0 %v853
  %v855 = vpop.xlane.xlu0 %854
  %v856 = vmul.f32 %v837, 0.0625
  %v857 = vmul.f32 %v840, 0.0625
  %v858 = vmul.f32 %v843, 0.0625
  %v859 = vmul.f32 %v846, 0.0625
  %v860 = vmul.f32 %v849, 0.0625
  %v861 = vmul.f32 %v852, 0.0625
  %v862 = vmul.f32 %v855, 0.0625
  %v863 = vmul.f32 %v821, %v821
  %v864 = vmul.f32 %v822, %v822
  %v865 = vmul.f32 %v823, %v823
  %v866 = vmul.f32 %v824, %v824
  %v867 = vmul.f32 %v825, %v825
  %v868 = vmul.f32 %v826, %v826
  %v869 = vmul.f32 %v827, %v827
  %v870 = vsub.f32 %v856, %v863
  %v871 = vsub.f32 %v857, %v864
  %v872 = vsub.f32 %v858, %v865
  %v873 = vsub.f32 %v859, %v866
  %v874 = vsub.f32 %v860, %v867
  %v875 = vsub.f32 %v861, %v868
  %v876 = vsub.f32 %v862, %v869
  %v877 = vmax.f32 %v870, 0.0
  %v878 = vmax.f32 %v871, 0.0
  %v879 = vmax.f32 %v872, 0.0
  %v880 = vmax.f32 %v873, 0.0
  %v881 = vmax.f32 %v874, 0.0
  %v882 = vmax.f32 %v875, 0.0
  %v883 = vmax.f32 %v876, 0.0
  %v884 = vsub.f32 %v793, %v821
  %v885 = vsub.f32 %v794, %v822
  %v886 = vsub.f32 %v795, %v823
  %v887 = vsub.f32 %v796, %v824
  %v888 = vsub.f32 %v797, %v825
  %v889 = vsub.f32 %v798, %v826
  %v890 = vsub.f32 %v799, %v827
  %v891 = vadd.f32 %v877, 1e-05
  %v892 = vadd.f32 %v878, 1e-05
  %v893 = vadd.f32 %v879, 1e-05
  %v894 = vadd.f32 %v880, 1e-05
  %v895 = vadd.f32 %v881, 1e-05
  %v896 = vadd.f32 %v882, 1e-05
  %v897 = vadd.f32 %v883, 1e-05
  %v898 = vrsqrt.pop %v891
  %v899 = vrsqrt.pop %v892
  %v900 = vrsqrt.pop %v893
  %v901 = vrsqrt.pop %v894
  %v902 = vrsqrt.pop %v895
  %v903 = vrsqrt.pop %v896
  %v904 = vrsqrt.pop %v897
  %v905 = vmul.f32 %v884, %v898
  %v906 = vmul.f32 %v885, %v899
  %v907 = vmul.f32 %v886, %v900
  %v908 = vmul.f32 %v887, %v901
  %v909 = vmul.f32 %v888, %v902
  %v910 = vmul.f32 %v889, %v903
  %v911 = vmul.f32 %v890, %v904
  %v912 = vlaneseq
  %v913 = vshrl.u32 %v912, 7
  %v914 = vsub.s32 0, %v913
  %v915 = vrot.slane %v21, %v914
  %v916 = vmul.f32 %v417, %v915
  %v917 = vmul.f32 %v418, %v915
  %v918 = vmul.f32 %v419, %v915
  %v919 = vmul.f32 %v420, %v915
  %v920 = vmul.f32 %v421, %v915
  %v921 = vmul.f32 %v422, %v915
  %v922 = vmul.f32 %v423, %v915
  %v923 = vlaneseq
  %v924 = vshrl.u32 %v923, 7
  %v925 = vsub.s32 0, %v924
  %v926 = vrot.slane %v22, %v925
  %v927 = vmul.f32 %v905, %v926
  %v928 = vmul.f32 %v906, %v926
  %v929 = vmul.f32 %v907, %v926
  %v930 = vmul.f32 %v908, %v926
  %v931 = vmul.f32 %v909, %v926
  %v932 = vmul.f32 %v910, %v926
  %v933 = vmul.f32 %v911, %v926
  %v934 = vadd.f32 %v916, %v927
  %v935 = vadd.f32 %v917, %v928
  %v936 = vadd.f32 %v918, %v929
  %v937 = vadd.f32 %v919, %v930
  %v938 = vadd.f32 %v920, %v931
  %v939 = vadd.f32 %v921, %v932
  %v940 = vadd.f32 %v922, %v933
  %v941 = vlaneseq
  %v942 = vshrl.u32 %v941, 7
  %v943 = vsub.s32 0, %v942
  %v944 = vrot.slane %v23, %v943
  %v945 = vadd.f32 %v934, %v944
  %v946 = vadd.f32 %v935, %v944
  %v947 = vadd.f32 %v936, %v944
  %v948 = vadd.f32 %v937, %v944
  %v949 = vadd.f32 %v938, %v944
  %v950 = vadd.f32 %v939, %v944
  %v951 = vadd.f32 %v940, %v944
  %vm952 = vcmask 457728
  %v954 = vsel %vm952, %v30, 0
  %v957 = vsel %vm952, %v31, 0
  %v960 = vsel %vm952, %v32, 0
  %v963 = vsel %vm952, %v33, 0
  %v966 = vsel %vm952, %v34, 0
  %v969 = vsel %vm952, %v35, 0
  %v972 = vsel %vm952, %v36, 0
  %v975 = vsel %vm952, %v37, 0
  %v978 = vsel %vm952, %v38, 0
  %v981 = vsel %vm952, %v39, 0
  %v984 = vsel %vm952, %v40, 0
  %v987 = vsel %vm952, %v41, 0
  %v990 = vsel %vm952, %v42, 0
  %v993 = vsel %vm952, %v43, 0
  %v996 = vsel %vm952, %v44, 0
  %v999 = vsel %vm952, %v45, 0
  %1001 = vmatprep.subr.mxu0 0.0
  %1002 = vmatpush1.msra.mxu0 0.0
  %1003 = vmatprep.subr.mxu0 0.0
  %1004 = vmatpush1.msra.mxu0 0.0
  %1005 = vmatprep.subr.mxu0 0.0
  %1006 = vmatpush1.msra.mxu0 0.0
  %1007 = vmatprep.subr.mxu0 0.0
  %1008 = vmatpush1.msra.mxu0 0.0
  %1009 = vmatprep.subr.mxu0 0.0
  %1010 = vmatpush1.msra.mxu0 0.0
  %1011 = vmatprep.subr.mxu0 0.0
  %1012 = vmatpush1.msra.mxu0 0.0
  %1013 = vmatprep.subr.mxu0 0.0
  %1014 = vmatpush1.msra.mxu0 0.0
  %1015 = vmatprep.subr.mxu0 0.0
  %1016 = vmatpush1.msra.mxu0 0.0
  %1017 = vmatprep.subr.mxu0 0.0
  %1018 = vmatpush1.msra.mxu0 0.0
  %1019 = vmatprep.subr.mxu0 0.0
  %1020 = vmatpush1.msra.mxu0 %v951
  %1021 = vmatprep.subr.mxu0 0.0
  %1022 = vmatpush1.msra.mxu0 %v950
  %1023 = vmatprep.subr.mxu0 0.0
  %1024 = vmatpush1.msra.mxu0 %v949
  %1025 = vmatprep.subr.mxu0 0.0
  %1026 = vmatpush1.msra.mxu0 %v948
  %1027 = vmatprep.subr.mxu0 0.0
  %1028 = vmatpush1.msra.mxu0 %v947
  %1029 = vmatprep.subr.mxu0 0.0
  %1030 = vmatpush1.msra.mxu0 %v946
  %1031 = vmatprep.subr.mxu0 0.0
  %1032 = vmatpush1.msra.mxu0 %v945
  %1033 = vmatprep.subr.mxu0 0.0
  %1034 = vmatpush2.msra.mxu0 0.0
  %1035 = vmatprep.subr.mxu0 0.0
  %1036 = vmatpush2.msra.mxu0 0.0
  %1037 = vmatprep.subr.mxu0 0.0
  %1038 = vmatpush2.msra.mxu0 0.0
  %1039 = vmatprep.subr.mxu0 0.0
  %1040 = vmatpush2.msra.mxu0 0.0
  %1041 = vmatprep.subr.mxu0 0.0
  %1042 = vmatpush2.msra.mxu0 0.0
  %1043 = vmatprep.subr.mxu0 0.0
  %1044 = vmatpush2.msra.mxu0 0.0
  %1045 = vmatprep.subr.mxu0 0.0
  %1046 = vmatpush2.msra.mxu0 0.0
  %1047 = vmatprep.subr.mxu0 0.0
  %1048 = vmatpush2.msra.mxu0 0.0
  %1049 = vmatprep.subr.mxu0 0.0
  %1050 = vmatpush2.msra.mxu0 0.0
  %1051 = vmatprep.subr.mxu0 0.0
  %1052 = vmatpush2.msra.mxu0 0.0
  %1053 = vmatprep.subr.mxu0 0.0
  %1054 = vmatpush2.msra.mxu0 0.0
  %1055 = vmatprep.subr.mxu0 0.0
  %1056 = vmatpush2.msra.mxu0 0.0
  %1057 = vmatprep.subr.mxu0 0.0
  %1058 = vmatpush2.msra.mxu0 0.0
  %1059 = vmatprep.subr.mxu0 0.0
  %1060 = vmatpush2.msra.mxu0 0.0
  %1061 = vmatprep.subr.mxu0 0.0
  %1062 = vmatpush2.msra.mxu0 0.0
  %1063 = vmatprep.subr.mxu0 0.0
  %1064 = vmatpush2.msra.mxu0 0.0
  %1065 = vmatprep.mubr.f32.mxu0 0.0
  %1066 = vmatmul.mubr.f32.gmra.mxu0 %v954
  %v1067 = vpop.f32.mrf.mxu0
  %v1068 = vadd.f32 0.0, %v1067
  %v1069 = vpop.f32.mrf.mxu0
  %1070 = vmatprep.mubr.f32.mxu0 0.0
  %1071 = vmatmul.mubr.f32.gmra.mxu0 %v957
  %v1072 = vpop.f32.mrf.mxu0
  %v1073 = vadd.f32 0.0, %v1072
  %v1074 = vpop.f32.mrf.mxu0
  %1075 = vmatprep.mubr.f32.mxu0 0.0
  %1076 = vmatmul.mubr.f32.gmra.mxu0 %v960
  %v1077 = vpop.f32.mrf.mxu0
  %v1078 = vadd.f32 0.0, %v1077
  %v1079 = vpop.f32.mrf.mxu0
  %1080 = vmatprep.mubr.f32.mxu0 0.0
  %1081 = vmatmul.mubr.f32.gmra.mxu0 %v963
  %v1082 = vpop.f32.mrf.mxu0
  %v1083 = vadd.f32 0.0, %v1082
  %v1084 = vpop.f32.mrf.mxu0
  %1085 = vmatprep.mubr.f32.mxu0 0.0
  %1086 = vmatmul.mubr.f32.gmra.mxu0 %v966
  %v1087 = vpop.f32.mrf.mxu0
  %v1088 = vadd.f32 0.0, %v1087
  %v1089 = vpop.f32.mrf.mxu0
  %1090 = vmatprep.mubr.f32.mxu0 0.0
  %1091 = vmatmul.mubr.f32.gmra.mxu0 %v969
  %v1092 = vpop.f32.mrf.mxu0
  %v1093 = vadd.f32 0.0, %v1092
  %v1094 = vpop.f32.mrf.mxu0
  %1095 = vmatprep.mubr.f32.mxu0 0.0
  %1096 = vmatmul.mubr.f32.gmra.mxu0 %v972
  %v1097 = vpop.f32.mrf.mxu0
  %v1098 = vadd.f32 0.0, %v1097
  %v1099 = vpop.f32.mrf.mxu0
  %1100 = vmatprep.mubr.f32.mxu0 0.0
  %1101 = vmatmul.mubr.f32.gmra.mxu0 %v975
  %v1102 = vpop.f32.mrf.mxu0
  %v1103 = vadd.f32 0.0, %v1102
  %v1104 = vpop.f32.mrf.mxu0
  %1105 = vmatprep.mubr.f32.mxu0 0.0
  %1106 = vmatmul.mubr.f32.gmra.mxu0 %v978
  %v1107 = vpop.f32.mrf.mxu0
  %v1108 = vadd.f32 0.0, %v1107
  %v1109 = vpop.f32.mrf.mxu0
  %1110 = vmatprep.mubr.f32.mxu0 0.0
  %1111 = vmatmul.mubr.f32.gmra.mxu0 %v981
  %v1112 = vpop.f32.mrf.mxu0
  %v1113 = vadd.f32 0.0, %v1112
  %v1114 = vpop.f32.mrf.mxu0
  %1115 = vmatprep.mubr.f32.mxu0 0.0
  %1116 = vmatmul.mubr.f32.gmra.mxu0 %v984
  %v1117 = vpop.f32.mrf.mxu0
  %v1118 = vadd.f32 0.0, %v1117
  %v1119 = vpop.f32.mrf.mxu0
  %1120 = vmatprep.mubr.f32.mxu0 0.0
  %1121 = vmatmul.mubr.f32.gmra.mxu0 %v987
  %v1122 = vpop.f32.mrf.mxu0
  %v1123 = vadd.f32 0.0, %v1122
  %v1124 = vpop.f32.mrf.mxu0
  %1125 = vmatprep.mubr.f32.mxu0 0.0
  %1126 = vmatmul.mubr.f32.gmra.mxu0 %v990
  %v1127 = vpop.f32.mrf.mxu0
  %v1128 = vadd.f32 0.0, %v1127
  %v1129 = vpop.f32.mrf.mxu0
  %1130 = vmatprep.mubr.f32.mxu0 0.0
  %1131 = vmatmul.mubr.f32.gmra.mxu0 %v993
  %v1132 = vpop.f32.mrf.mxu0
  %v1133 = vadd.f32 0.0, %v1132
  %v1134 = vpop.f32.mrf.mxu0
  %1135 = vmatprep.mubr.f32.mxu0 0.0
  %1136 = vmatmul.mubr.f32.gmra.mxu0 %v996
  %v1137 = vpop.f32.mrf.mxu0
  %v1138 = vadd.f32 0.0, %v1137
  %v1139 = vpop.f32.mrf.mxu0
  %1140 = vmatprep.mubr.f32.mxu0 0.0
  %1141 = vmatmul.mubr.f32.gmra.mxu0 %v999
  %v1142 = vpop.f32.mrf.mxu0
  %v1143 = vadd.f32 0.0, %v1142
  %v1144 = vpop.f32.mrf.mxu0
  %1145 = vdwg.mxu0
  %v1146 = vld [vmem:[%s0] sm:$0xff]
  %v1147 = vld [vmem:[%s0 + $0x8] sm:$0xff]
  %v1148 = vld [vmem:[%s0 + $0x10] sm:$0xff]
  %v1149 = vld [vmem:[%s0 + $0x18] sm:$0xff]
  %v1150 = vld [vmem:[%s0 + $0x20] sm:$0xff]
  %v1151 = vld [vmem:[%s0 + $0x28] sm:$0xff]
  %v1152 = vld [vmem:[%s0 + $0x30] sm:$0xff]
  %v1153 = vld [vmem:[%s0 + $0x38] sm:$0xff]
  %v1154 = vld [vmem:[%s0 + $0x40] sm:$0xff]
  %v1155 = vld [vmem:[%s0 + $0x48] sm:$0xff]
  %v1156 = vld [vmem:[%s0 + $0x50] sm:$0xff]
  %v1157 = vld [vmem:[%s0 + $0x58] sm:$0xff]
  %v1158 = vld [vmem:[%s0 + $0x60] sm:$0xff]
  %v1159 = vld [vmem:[%s0 + $0x68] sm:$0xff]
  %v1160 = vld [vmem:[%s0 + $0x70] sm:$0xff]
  %v1161 = vld [vmem:[%s0 + $0x78] sm:$0xff]
  %v1162 = vadd.f32 %v1146, %v1068
  %v1163 = vadd.f32 %v1147, %v1073
  %v1164 = vadd.f32 %v1148, %v1078
  %v1165 = vadd.f32 %v1149, %v1083
  %v1166 = vadd.f32 %v1150, %v1088
  %v1167 = vadd.f32 %v1151, %v1093
  %v1168 = vadd.f32 %v1152, %v1098
  %v1169 = vadd.f32 %v1153, %v1103
  %v1170 = vadd.f32 %v1154, %v1108
  %v1171 = vadd.f32 %v1155, %v1113
  %v1172 = vadd.f32 %v1156, %v1118
  %v1173 = vadd.f32 %v1157, %v1123
  %v1174 = vadd.f32 %v1158, %v1128
  %v1175 = vadd.f32 %v1159, %v1133
  %v1176 = vadd.f32 %v1160, %v1138
  %v1177 = vadd.f32 %v1161, %v1143
  %1178 = vst.msk [vmem:[%s4] sm:$0xff] %vm183, %v1162
  %1179 = vst.msk [vmem:[%s4 + $0x8] sm:$0xff] %vm183, %v1163
  %1180 = vst.msk [vmem:[%s4 + $0x10] sm:$0xff] %vm183, %v1164
  %1181 = vst.msk [vmem:[%s4 + $0x18] sm:$0xff] %vm183, %v1165
  %1182 = vst.msk [vmem:[%s4 + $0x20] sm:$0xff] %vm183, %v1166
  %1183 = vst.msk [vmem:[%s4 + $0x28] sm:$0xff] %vm183, %v1167
  %1184 = vst.msk [vmem:[%s4 + $0x30] sm:$0xff] %vm183, %v1168
  %1185 = vst.msk [vmem:[%s4 + $0x38] sm:$0xff] %vm183, %v1169
  %1186 = vst.msk [vmem:[%s4 + $0x40] sm:$0xff] %vm183, %v1170
  %1187 = vst.msk [vmem:[%s4 + $0x48] sm:$0xff] %vm183, %v1171
  %1188 = vst.msk [vmem:[%s4 + $0x50] sm:$0xff] %vm183, %v1172
  %1189 = vst.msk [vmem:[%s4 + $0x58] sm:$0xff] %vm183, %v1173
  %1190 = vst.msk [vmem:[%s4 + $0x60] sm:$0xff] %vm183, %v1174
  %1191 = vst.msk [vmem:[%s4 + $0x68] sm:$0xff] %vm183, %v1175
  %1192 = vst.msk [vmem:[%s4 + $0x70] sm:$0xff] %vm183, %v1176
  %1193 = vst.msk [vmem:[%s4 + $0x78] sm:$0xff] %vm183, %v1177
  // Predicated region
  $region18: #{inside_pad_meta.1} parent=0 // pred_check
    _
  $region19: #{inside_pad_meta.1} parent=0 // pred_check_branch
    %1195 = sbr.rel (0) target = $region21
  $region20: #{inside_pad_meta.1} parent=0 // pred_region
    _
  $region21: #{inside_pad_meta.1} parent=0 // pred_fallthru
    _
  // Predicated region
  $region22: #{inside_pad_meta.1} parent=0 // pred_check
    _
  $region23: #{inside_pad_meta.1} parent=0 // pred_check_branch
    %1197 = sbr.rel (0) target = $region25
  $region24: #{inside_pad_meta.1} parent=0 // pred_region
    _
  $region25: #{inside_pad_meta.1} parent=0 // pred_fallthru
    _

</llo_original>
